<compile_context>
chip_gen: v5e
topology: v5e:2x2
jax: 0.10.0
libtpu: 0.0.40
codegen_flags: <defaults>
</compile_context>

<pallas_src>
import functools
import math

import jax
import jax.numpy as jnp
import numpy as np
from jax.experimental import pallas as pl
from jax.experimental.pallas import tpu as pltpu

_LN_EPS = 1e-5


def _et_patch_embed_kernel(p_ref, w_ref, pool_ref, g_ref, beta_ref, out_ref,
                           *, bb, lo):
    # p_ref:    (1, CKp, Bb*Lo) bf16  im2col patches^T; padded row `ck` is 1.0
    #                                 so the conv bias rides the MXU pass.
    # w_ref:    (E, CKp)        bf16  flattened conv weight (+ bias column).
    # pool_ref: (Lo, E)         bf16  shared adaptive-avg-pool matrix.
    # g_ref:    (1, E) f32, beta_ref: (1, E) f32   LayerNorm affine.
    # out_ref:  (1, E, Bb*E)    f32   lane-dense output slab.
    proj = jnp.dot(w_ref[...], p_ref[0],
                   preferred_element_type=jnp.float32)            # (E, Bb*Lo)
    act = jnp.maximum(proj, 0.0).astype(jnp.bfloat16)             # ReLU; bf16 MXU operand

    gamma = g_ref[...]
    beta = beta_ref[...]
    pool = pool_ref[...]

    outs = []
    for j in range(bb):                                           # bb is small & static
        pj = jnp.dot(act[:, j * lo:(j + 1) * lo], pool,
                     preferred_element_type=jnp.float32)          # (E, E) lane-major
        mu = jnp.mean(pj, axis=-1, keepdims=True)
        var = jnp.mean((pj - mu) ** 2, axis=-1, keepdims=True)
        y = (pj - mu) * jax.lax.rsqrt(var + _LN_EPS)
        outs.append(y * gamma + beta)

    slab = outs[0] if bb == 1 else jnp.concatenate(outs, axis=-1)  # (E, Bb*E)
    out_ref[0] = slab.astype(out_ref.dtype)                        # one lane-dense store


def _im2col_1d(x_ncl, k, stride, padding):
    """x: (B, C, L) -> transposed patches (B, C*k, Lo); feature axis ordered (c, ki)."""
    B, C, L = x_ncl.shape
    Lo = (L + 2 * padding - k) // stride + 1
    xp = jnp.pad(x_ncl, ((0, 0), (0, 0), (padding, padding)))
    cols = [xp[:, :, i:i + stride * (Lo - 1) + 1:stride] for i in range(k)]
    p = jnp.stack(cols, axis=2)                     # (B, C, k, Lo)
    return p.reshape(B, C * k, Lo), Lo


def _adaptive_pool1d_matrix(n_in, n_out):
    """PyTorch AdaptiveAvgPool1d as a (n_in, n_out) right-multiply matrix."""
    P = np.zeros((n_in, n_out), np.float32)
    for i in range(n_out):
        s = (i * n_in) // n_out
        e = math.ceil((i + 1) * n_in / n_out)
        P[s:e, i] = 1.0 / (e - s)
    return P


def _choose_block(B, Lo, ckp, E):
    """Pick bb (batch items fused per grid step; always divides B).

    Goals: fill the 256-wide v6e/v7x MXU (Bb*Lo >= 256), keep >= 2 grid steps
    for v7x megacore when possible, and stay inside a VMEM budget sized for
    v7x's 32 MiB default-scoped VMEM (inputs are double-buffered by Pallas).
    """
    divisors = [d for d in range(1, B + 1) if B % d == 0]

    def vmem_bytes(bb):
        lanes = bb * Lo
        return (2 * ckp * lanes * 2          # double-buffered bf16 patches tile
                + 2 * E * ckp * 2            # double-buffered bf16 conv weight
                + 2 * Lo * E * 2             # double-buffered bf16 pool matrix
                + E * lanes * 4              # f32 proj/act temporary
                + E * lanes * 2              # bf16 act for the pool matmul
                + 2 * E * bb * E * 4         # double-buffered f32 output slab
                + (1 << 20))                 # headroom (vregs / misc)

    budget = 24 << 20                        # leave slack under 32 MiB scoped VMEM
    fitting = [d for d in divisors if vmem_bytes(d) <= budget] or [1]

    # Smallest bb whose lane width fills the 256-wide MXU; else largest fitting.
    bb = fitting[-1]
    for d in fitting:
        if d * Lo >= 256:
            bb = d
            break

    # v7x megacore: prefer >= 2 grid steps if that still leaves >= 256 lanes.
    if B // bb < 2:
        for d in sorted(fitting, reverse=True):
            if d < bb and B // d >= 2 and d * Lo >= 256:
                bb = d
                break
    return bb


def et_patch_embed(x, conv_w, conv_b, ln_gamma, ln_beta, *, stride, padding):
    """Pallas implementation of ETPatchEmbed.forward.

    x: (B, L, C) -> (B, E, E) matching
      LayerNorm(AdaptiveAvgPool1d(E)(ReLU(Conv1d(x.transpose(1, 2))))).
    """
    B, L, C = x.shape
    E, Cw, k = conv_w.shape
    assert Cw == C

    xt = jnp.transpose(x, (0, 2, 1))                      # x.transpose(1, 2): (B, C, L)
    patches_t, Lo = _im2col_1d(xt, k, stride, padding)    # (B, C*k, Lo)

    # Pad the contraction dim only to the next bf16 sublane multiple (16), with
    # one extra row for the conv bias (folded into the MXU pass: constant-1
    # patch row + bias column in the weight).
    ck = C * k
    ckp = -(-(ck + 1) // 16) * 16
    patches_t = jnp.pad(patches_t, ((0, 0), (0, ckp - ck), (0, 0)))
    patches_t = patches_t.at[:, ck, :].set(1.0)
    w_flat = jnp.pad(conv_w.reshape(E, ck), ((0, 0), (0, ckp - ck)))
    w_flat = w_flat.at[:, ck].set(conv_b)

    bb = _choose_block(B, Lo, ckp, E)
    assert B % bb == 0
    bg = B // bb

    # Group Bb batch items into the lane axis: (Bg, CKp, Bb*Lo); bf16 MXU operand.
    pk = patches_t.reshape(bg, bb, ckp, Lo).transpose(0, 2, 1, 3)
    pk = pk.reshape(bg, ckp, bb * Lo).astype(jnp.bfloat16)
    w_bf = w_flat.astype(jnp.bfloat16)

    # Shared (Lo, E) adaptive-pool matrix; contracted per batch segment (no kron).
    pool = jnp.asarray(_adaptive_pool1d_matrix(Lo, E)).astype(jnp.bfloat16)

    out = pl.pallas_call(
        functools.partial(_et_patch_embed_kernel, bb=bb, lo=Lo),
        out_shape=jax.ShapeDtypeStruct((bg, E, bb * E), jnp.float32),
        grid_spec=pltpu.PrefetchScalarGridSpec(
            num_scalar_prefetch=0,
            grid=(bg,),
            in_specs=[
                pl.BlockSpec((1, ckp, bb * Lo), lambda i: (i, 0, 0)),   # patches^T
                pl.BlockSpec((E, ckp), lambda i: (0, 0)),               # conv W (+bias col)
                pl.BlockSpec((Lo, E), lambda i: (0, 0)),                # pool matrix
                pl.BlockSpec((1, E), lambda i: (0, 0)),                 # LN gamma
                pl.BlockSpec((1, E), lambda i: (0, 0)),                 # LN beta
            ],
            out_specs=pl.BlockSpec((1, E, bb * E), lambda i: (i, 0, 0)),
        ),
        compiler_params=pltpu.CompilerParams(
            dimension_semantics=("parallel",),
            vmem_limit_bytes=32 * 1024 * 1024),
    )(pk, w_bf, pool,
      ln_gamma.reshape(1, E).astype(jnp.float32),
      ln_beta.reshape(1, E).astype(jnp.float32))

    # Lane-dense (Bg, E, Bb*E) slab -> (B, E, E).
    return out.reshape(bg, E, bb, E).transpose(0, 2, 1, 3).reshape(B, E, E)


def _reference(x, conv_w, conv_b, ln_gamma, ln_beta, stride, padding,
               *, match_kernel_rounding=False):
    """Pure-JAX reference of the PyTorch ETPatchEmbed forward.

    With match_kernel_rounding=True it models the kernel's intentional bf16
    roundings (conv operands, folded bias, post-ReLU activation and pool
    matrix) so the tight check isolates kernel math from those casts.
    """
    B, L, C = x.shape
    E, _, k = conv_w.shape
    f32 = jnp.float32
    if match_kernel_rounding:
        x = x.astype(jnp.bfloat16).astype(f32)
        conv_w = conv_w.astype(jnp.bfloat16).astype(f32)
        conv_b = conv_b.astype(jnp.bfloat16).astype(f32)
    xt = jnp.transpose(x, (0, 2, 1))[:, :, :, None]              # (B, C, L, 1)
    w4 = conv_w[:, :, :, None]                                   # (E, C, k, 1)
    y = jax.lax.conv_general_dilated(
        xt, w4, window_strides=(stride, 1),
        padding=[(padding, padding), (0, 0)],
        dimension_numbers=("NCHW", "OIHW", "NCHW"),
        precision=jax.lax.Precision.HIGHEST)[:, :, :, 0]         # (B, E, Lo)
    y = jnp.maximum(y + conv_b[None, :, None], 0.0)              # bias + ReLU
    Lo = y.shape[-1]
    if match_kernel_rounding:
        y = y.astype(jnp.bfloat16).astype(f32)
        pool = jnp.asarray(_adaptive_pool1d_matrix(Lo, E)).astype(jnp.bfloat16).astype(f32)
        p = jnp.einsum("bel,lp->bep", y, pool,
                       precision=jax.lax.Precision.HIGHEST)      # (B, E, E)
    else:
        pooled = []
        for i in range(E):                                       # AdaptiveAvgPool1d(E)
            s = (i * Lo) // E
            e = math.ceil((i + 1) * Lo / E)
            pooled.append(jnp.mean(y[:, :, s:e], axis=-1))
        p = jnp.stack(pooled, axis=-1)                           # (B, E, E)
    mu = jnp.mean(p, axis=-1, keepdims=True)
    var = jnp.mean((p - mu) ** 2, axis=-1, keepdims=True)
    return ((p - mu) / jnp.sqrt(var + _LN_EPS)
            * ln_gamma[None, None, :] + ln_beta[None, None, :])


if __name__ == "__main__":
    # Small shapes consistent with the module defaults (in_channels=4,
    # kernel_size=15, stride=1, padding=7) with a small embed_dim=32, batch=2,
    # sequence length 64. Output is (B, E, E).
    B, L, C = 2, 64, 4
    E, K, S, P = 32, 15, 1, 7

    key = jax.random.PRNGKey(0)
    kx, kw, kb, kg, kbe = jax.random.split(key, 5)
    x = jax.random.normal(kx, (B, L, C), jnp.float32)
    conv_w = 0.05 * jax.random.normal(kw, (E, C, K), jnp.float32)
    conv_b = 0.05 * jax.random.normal(kb, (E,), jnp.float32)
    ln_gamma = 1.0 + 0.1 * jax.random.normal(kg, (E,), jnp.float32)
    ln_beta = 0.1 * jax.random.normal(kbe, (E,), jnp.float32)

    out = et_patch_embed(x, conv_w, conv_b, ln_gamma, ln_beta,
                         stride=S, padding=P)
    out = jax.block_until_ready(out)
    assert out.shape == (B, E, E), out.shape

    # Tight check: reference modelling the kernel's bf16 roundings (operands,
    # folded bias, post-ReLU activation, pool matrix). Tolerance leaves room
    # for one-ulp bf16 requantization flips caused by MXU accumulation order.
    ref_matched = _reference(x, conv_w, conv_b, ln_gamma, ln_beta, S, P,
                             match_kernel_rounding=True)
    err_m = float(jnp.max(jnp.abs(out - ref_matched)))
    assert jnp.allclose(out, ref_matched, atol=2e-2, rtol=2e-2), \
        f"max abs err vs precision-matched reference = {err_m}"

    # Loose check: full-f32 reference (bounds total bf16 drift).
    ref = _reference(x, conv_w, conv_b, ln_gamma, ln_beta, S, P)
    err_f = float(jnp.max(jnp.abs(out - ref)))
    assert jnp.allclose(out, ref, atol=8e-2, rtol=8e-2), \
        f"max abs err vs f32 reference = {err_f}"

    print("KERNEL_OK")
</pallas_src>

<mosaic_0001>
module attributes {stable_mosaic.version = 11 : i64} {
  func.func @_et_patch_embed_kernel(%arg0: i32, %arg1: memref<1x64x128xbf16, #tpu.memory_space<vmem>>, %arg2: memref<32x64xbf16, #tpu.memory_space<vmem>>, %arg3: memref<64x32xbf16, #tpu.memory_space<vmem>>, %arg4: memref<1x32xf32, #tpu.memory_space<vmem>>, %arg5: memref<1x32xf32, #tpu.memory_space<vmem>>, %arg6: memref<1x32x64xf32, #tpu.memory_space<vmem>>) attributes {dimension_semantics = [#tpu.dimension_semantics<parallel>], iteration_bounds = array<i64: 1>, scalar_prefetch = 0 : i64, scratch_operands = 0 : i64, tpu.core_type = #tpu.core_type<tc>, window_params = [{transform_indices = @transform_0, window_bounds = array<i64: 1, 64, 128>}, {pipeline_mode = #tpu.pipeline_mode<synchronous>, transform_indices = @transform_1, window_bounds = array<i64: 32, 64>}, {pipeline_mode = #tpu.pipeline_mode<synchronous>, transform_indices = @transform_2, window_bounds = array<i64: 64, 32>}, {pipeline_mode = #tpu.pipeline_mode<synchronous>, transform_indices = @transform_3, window_bounds = array<i64: 1, 32>}, {pipeline_mode = #tpu.pipeline_mode<synchronous>, transform_indices = @transform_4, window_bounds = array<i64: 1, 32>}, {transform_indices = @transform_5, window_bounds = array<i64: 1, 32, 64>}]} {
    %c0 = arith.constant 0 : index
    %c0_0 = arith.constant 0 : index
    %0 = vector.load %arg2[%c0, %c0_0] : memref<32x64xbf16, #tpu.memory_space<vmem>>, vector<32x64xbf16>
    %c0_1 = arith.constant 0 : index
    %c0_2 = arith.constant 0 : index
    %c0_3 = arith.constant 0 : index
    %1 = vector.load %arg1[%c0_1, %c0_2, %c0_3] : memref<1x64x128xbf16, #tpu.memory_space<vmem>>, vector<1x64x128xbf16>
    %2 = vector.shape_cast %1 : vector<1x64x128xbf16> to vector<64x128xbf16>
    %cst = arith.constant dense<0.000000e+00> : vector<32x128xf32>
    %3 = tpu.matmul %0, %2, %cst {dimension_numbers = #tpu.dot_dimension_numbers<[1], [0], [0], [1], [0, 0, 1, 1], [], []>} : vector<32x64xbf16>, vector<64x128xbf16>, vector<32x128xf32> -> vector<32x128xf32>
    %cst_4 = arith.constant 0.000000e+00 : f32
    %4 = vector.broadcast %cst_4 : f32 to vector<32x128xf32>
    %5 = arith.maximumf %3, %4 : vector<32x128xf32>
    %6 = arith.truncf %5 : vector<32x128xf32> to vector<32x128xbf16>
    %c0_5 = arith.constant 0 : index
    %c0_6 = arith.constant 0 : index
    %7 = vector.load %arg4[%c0_5, %c0_6] : memref<1x32xf32, #tpu.memory_space<vmem>>, vector<1x32xf32>
    %c0_7 = arith.constant 0 : index
    %c0_8 = arith.constant 0 : index
    %8 = vector.load %arg5[%c0_7, %c0_8] : memref<1x32xf32, #tpu.memory_space<vmem>>, vector<1x32xf32>
    %c0_9 = arith.constant 0 : index
    %c0_10 = arith.constant 0 : index
    %9 = vector.load %arg3[%c0_9, %c0_10] : memref<64x32xbf16, #tpu.memory_space<vmem>>, vector<64x32xbf16>
    %10 = vector.extract_strided_slice %6 {offsets = [0, 0], sizes = [32, 64], strides = [1, 1]} : vector<32x128xbf16> to vector<32x64xbf16>
    %cst_11 = arith.constant dense<0.000000e+00> : vector<32x32xf32>
    %11 = tpu.matmul %10, %9, %cst_11 {dimension_numbers = #tpu.dot_dimension_numbers<[1], [0], [0], [1], [0, 0, 1, 1], [], []>} : vector<32x64xbf16>, vector<64x32xbf16>, vector<32x32xf32> -> vector<32x32xf32>
    %cst_12 = arith.constant dense<0.000000e+00> : vector<32xf32>
    %12 = vector.multi_reduction <add>, %11, %cst_12 [1] : vector<32x32xf32> to vector<32xf32>
    %13 = vector.shape_cast %12 : vector<32xf32> to vector<32x1xf32>
    %cst_13 = arith.constant 3.200000e+01 : f32
    %14 = vector.broadcast %cst_13 : f32 to vector<32x1xf32>
    %15 = arith.divf %13, %14 : vector<32x1xf32>
    %16 = vector.broadcast %15 : vector<32x1xf32> to vector<32x32xf32>
    %17 = arith.subf %11, %16 : vector<32x32xf32>
    %18 = arith.mulf %17, %17 : vector<32x32xf32>
    %cst_14 = arith.constant dense<0.000000e+00> : vector<32xf32>
    %19 = vector.multi_reduction <add>, %18, %cst_14 [1] : vector<32x32xf32> to vector<32xf32>
    %20 = vector.shape_cast %19 : vector<32xf32> to vector<32x1xf32>
    %cst_15 = arith.constant 3.200000e+01 : f32
    %21 = vector.broadcast %cst_15 : f32 to vector<32x1xf32>
    %22 = arith.divf %20, %21 : vector<32x1xf32>
    %23 = vector.broadcast %15 : vector<32x1xf32> to vector<32x32xf32>
    %24 = arith.subf %11, %23 : vector<32x32xf32>
    %cst_16 = arith.constant 9.99999974E-6 : f32
    %25 = vector.broadcast %cst_16 : f32 to vector<32x1xf32>
    %26 = arith.addf %22, %25 : vector<32x1xf32>
    %27 = math.rsqrt %26 : vector<32x1xf32>
    %28 = vector.broadcast %27 : vector<32x1xf32> to vector<32x32xf32>
    %29 = arith.mulf %24, %28 : vector<32x32xf32>
    %30 = vector.broadcast %7 : vector<1x32xf32> to vector<32x32xf32>
    %31 = arith.mulf %29, %30 : vector<32x32xf32>
    %32 = vector.broadcast %8 : vector<1x32xf32> to vector<32x32xf32>
    %33 = arith.addf %31, %32 : vector<32x32xf32>
    %34 = vector.extract_strided_slice %6 {offsets = [0, 64], sizes = [32, 64], strides = [1, 1]} : vector<32x128xbf16> to vector<32x64xbf16>
    %cst_17 = arith.constant dense<0.000000e+00> : vector<32x32xf32>
    %35 = tpu.matmul %34, %9, %cst_17 {dimension_numbers = #tpu.dot_dimension_numbers<[1], [0], [0], [1], [0, 0, 1, 1], [], []>} : vector<32x64xbf16>, vector<64x32xbf16>, vector<32x32xf32> -> vector<32x32xf32>
    %cst_18 = arith.constant dense<0.000000e+00> : vector<32xf32>
    %36 = vector.multi_reduction <add>, %35, %cst_18 [1] : vector<32x32xf32> to vector<32xf32>
    %37 = vector.shape_cast %36 : vector<32xf32> to vector<32x1xf32>
    %cst_19 = arith.constant 3.200000e+01 : f32
    %38 = vector.broadcast %cst_19 : f32 to vector<32x1xf32>
    %39 = arith.divf %37, %38 : vector<32x1xf32>
    %40 = vector.broadcast %39 : vector<32x1xf32> to vector<32x32xf32>
    %41 = arith.subf %35, %40 : vector<32x32xf32>
    %42 = arith.mulf %41, %41 : vector<32x32xf32>
    %cst_20 = arith.constant dense<0.000000e+00> : vector<32xf32>
    %43 = vector.multi_reduction <add>, %42, %cst_20 [1] : vector<32x32xf32> to vector<32xf32>
    %44 = vector.shape_cast %43 : vector<32xf32> to vector<32x1xf32>
    %cst_21 = arith.constant 3.200000e+01 : f32
    %45 = vector.broadcast %cst_21 : f32 to vector<32x1xf32>
    %46 = arith.divf %44, %45 : vector<32x1xf32>
    %47 = vector.broadcast %39 : vector<32x1xf32> to vector<32x32xf32>
    %48 = arith.subf %35, %47 : vector<32x32xf32>
    %cst_22 = arith.constant 9.99999974E-6 : f32
    %49 = vector.broadcast %cst_22 : f32 to vector<32x1xf32>
    %50 = arith.addf %46, %49 : vector<32x1xf32>
    %51 = math.rsqrt %50 : vector<32x1xf32>
    %52 = vector.broadcast %51 : vector<32x1xf32> to vector<32x32xf32>
    %53 = arith.mulf %48, %52 : vector<32x32xf32>
    %54 = vector.broadcast %7 : vector<1x32xf32> to vector<32x32xf32>
    %55 = arith.mulf %53, %54 : vector<32x32xf32>
    %56 = vector.broadcast %8 : vector<1x32xf32> to vector<32x32xf32>
    %57 = arith.addf %55, %56 : vector<32x32xf32>
    %58 = tpu.concatenate %33, %57 in 1 : vector<32x32xf32>, vector<32x32xf32> -> vector<32x64xf32>
    %c0_23 = arith.constant 0 : index
    %c0_24 = arith.constant 0 : index
    %c0_25 = arith.constant 0 : index
    %59 = vector.load %arg6[%c0_23, %c0_24, %c0_25] : memref<1x32x64xf32, #tpu.memory_space<vmem>>, vector<1x32x64xf32>
    %60 = vector.shape_cast %59 : vector<1x32x64xf32> to vector<32x64xf32>
    %61 = vector.shape_cast %58 : vector<32x64xf32> to vector<1x32x64xf32>
    tpu.vector_store %arg6[%c0_23, %c0_24, %c0_25], %61 {strides = array<i32>} : memref<1x32x64xf32, #tpu.memory_space<vmem>>, vector<1x32x64xf32>,
    return
  }
  func.func @transform_0(%arg0: i32) -> (i32, i32, i32) {
    %c0_i32 = arith.constant 0 : i32
    %c0_i32_0 = arith.constant 0 : i32
    %c0_i32_1 = arith.constant 0 : i32
    return %arg0, %c0_i32, %c0_i32_0 : i32, i32, i32
  }
  func.func @transform_1(%arg0: i32) -> (i32, i32) {
    %c0_i32 = arith.constant 0 : i32
    %c0_i32_0 = arith.constant 0 : i32
    %c0_i32_1 = arith.constant 0 : i32
    return %c0_i32, %c0_i32_0 : i32, i32
  }
  func.func @transform_2(%arg0: i32) -> (i32, i32) {
    %c0_i32 = arith.constant 0 : i32
    %c0_i32_0 = arith.constant 0 : i32
    %c0_i32_1 = arith.constant 0 : i32
    return %c0_i32, %c0_i32_0 : i32, i32
  }
  func.func @transform_3(%arg0: i32) -> (i32, i32) {
    %c0_i32 = arith.constant 0 : i32
    %c0_i32_0 = arith.constant 0 : i32
    %c0_i32_1 = arith.constant 0 : i32
    return %c0_i32, %c0_i32_0 : i32, i32
  }
  func.func @transform_4(%arg0: i32) -> (i32, i32) {
    %c0_i32 = arith.constant 0 : i32
    %c0_i32_0 = arith.constant 0 : i32
    %c0_i32_1 = arith.constant 0 : i32
    return %c0_i32, %c0_i32_0 : i32, i32
  }
  func.func @transform_5(%arg0: i32) -> (i32, i32, i32) {
    %c0_i32 = arith.constant 0 : i32
    %c0_i32_0 = arith.constant 0 : i32
    %c0_i32_1 = arith.constant 0 : i32
    return %arg0, %c0_i32, %c0_i32_0 : i32, i32, i32
  }
}

</mosaic_0001>

<llo_original>
// kernel: tpu_custom_call.1
$region0: #{tpu_custom_call.1}
  #allocation0 [shape = 'u32[]', space=smem, size = 0x4, offset = 0x4, fixed_abs, tag = 'smem constant byte address 0x4 - core index']
  #allocation1 [shape = 'u32[72,128]{1,0:T(1,128)}', space=vmem, size = 0x9000, scoped, tag = 'internal scratch']
  %s0 = inlined_call_operand.vmem [shape: bf16[1,64,128], index: 0, kind: input, shape index: {}]
  %s1 = inlined_call_operand.vmem [shape: bf16[32,64], index: 1, kind: input, shape index: {}]
  %s2 = inlined_call_operand.vmem [shape: bf16[64,32], index: 2, kind: input, shape index: {}]
  %s3 = inlined_call_operand.vmem [shape: f32[1,32], index: 3, kind: input, shape index: {}]
  %s4 = inlined_call_operand.vmem [shape: f32[1,32], index: 4, kind: input, shape index: {}]
  %s5 = inlined_call_operand.hbm [shape: f32[1,32,64], index: 5, kind: output, shape index: {}]
  %s6 = sld [smem:[#allocation0]]
  $region30: #{tpu_custom_call.1} parent=0
    _
  %s8 = ssub.s32 1, %s6
  %s9 = scalar_select 0, %s8, %s6
  $region1: #{tpu_custom_call.1} parent=0
    #allocation2 [shape = 'u8[16384]{0}', space=vmem, size = 0x4000, scoped, tag = 'output window, operand 0, single buffered']
    #allocation3 [shape = 's32[1]{0}', space=sflag, size = 0x4, scoped, tag = 'scoped memory for tpu_custom_call.1']
    %10 = vsyncpa [#allocation3], 0
    // Predicated region
    $region2: #{tpu_custom_call.1} parent=1 // pred_check
      _
    $region3: #{tpu_custom_call.1} parent=1 // pred_check_branch
      %12 = sbr.rel (0) target = $region5
    $region4: #{tpu_custom_call.1} parent=1 // pred_region
      _
    $region5: #{tpu_custom_call.1} parent=1 // pred_fallthru
      _
    // Predicated region
    $region6: #{tpu_custom_call.1} parent=1 // pred_check
      _
    $region7: #{tpu_custom_call.1} parent=1 // pred_check_branch
      %14 = sbr.rel (0) target = $region9
    $region8: #{tpu_custom_call.1} parent=1 // pred_region
      _
    $region9: #{tpu_custom_call.1} parent=1 // pred_fallthru
      _
    // Predicated region
    $region10: #{tpu_custom_call.1} parent=1 // pred_check
      _
    $region11: #{tpu_custom_call.1} parent=1 // pred_check_branch
      %16 = sbr.rel (0) target = $region13
    $region12: #{tpu_custom_call.1} parent=1 // pred_region
      _
    $region13: #{tpu_custom_call.1} parent=1 // pred_fallthru
      _
    // Predicated region
    $region14: #{tpu_custom_call.1} parent=1 // pred_check
      _
    $region15: #{tpu_custom_call.1} parent=1 // pred_check_branch
      %18 = sbr.rel (0) target = $region17
    $region16: #{tpu_custom_call.1} parent=1 // pred_region
      _
    $region17: #{tpu_custom_call.1} parent=1 // pred_fallthru
      _
    // Predicated region
    $region18: #{tpu_custom_call.1} parent=1 // pred_check
      _
    $region19: #{tpu_custom_call.1} parent=1 // pred_check_branch
      %20 = sbr.rel (0) target = $region21
    $region20: #{tpu_custom_call.1} parent=1 // pred_region
      _
    $region21: #{tpu_custom_call.1} parent=1 // pred_fallthru
      _
    %v22 = vld [vmem:[%s1] sm:$0xf]
    %v23 = vld [vmem:[%s1 + $0x4] sm:$0xf]
    %v24 = vld [vmem:[%s1 + $0x8] sm:$0xf]
    %v25 = vld [vmem:[%s1 + $0xc] sm:$0xf]
    %v26 = vld [vmem:[%s0] sm:$0xf]
    %v27 = vld [vmem:[%s0 + $0x4] sm:$0xf]
    %v28 = vld [vmem:[%s0 + $0x8] sm:$0xf]
    %v29 = vld [vmem:[%s0 + $0xc] sm:$0xf]
    %v30 = vld [vmem:[%s0 + $0x10] sm:$0xf]
    %v31 = vld [vmem:[%s0 + $0x14] sm:$0xf]
    %v32 = vld [vmem:[%s0 + $0x18] sm:$0xf]
    %v33 = vld [vmem:[%s0 + $0x1c] sm:$0xf]
    %v38 = vunpack.c.l.b16 %v22
    %v39 = vunpack.c.l.b16 %v23
    %v40 = vunpack.c.l.b16 %v24
    %v41 = vunpack.c.l.b16 %v25
    %v42 = vpack.c.b16 %v39, %v38
    %v43 = vpack.c.b16 %v41, %v40
    %v52 = vunpack.c.l.b16 %v26
    %v53 = vunpack.c.l.b16 %v27
    %v54 = vunpack.c.l.b16 %v28
    %v55 = vunpack.c.l.b16 %v29
    %v56 = vunpack.c.l.b16 %v30
    %v57 = vunpack.c.l.b16 %v31
    %v58 = vunpack.c.l.b16 %v32
    %v59 = vunpack.c.l.b16 %v33
    %v60 = vpack.c.b16 %v53, %v52
    %v61 = vpack.c.b16 %v55, %v54
    %v62 = vpack.c.b16 %v57, %v56
    %v63 = vpack.c.b16 %v59, %v58
    %vm68 = vcmask 523264
    %v70 = vsel %vm68, %v42, 0
    %v73 = vsel %vm68, %v43, 0
    %75 = vmatpush.bf16.msra.mxu0 0
    %76 = vmatpush.bf16.msra.mxu0 0
    %77 = vmatpush.bf16.msra.mxu0 0
    %78 = vmatpush.bf16.msra.mxu0 0
    %79 = vmatpush.bf16.msra.mxu0 %v63
    %80 = vmatpush.bf16.msra.mxu0 %v62
    %81 = vmatpush.bf16.msra.mxu0 %v61
    %82 = vmatpush.bf16.msra.mxu0 %v60
    %83 = vmatmul.bf16.gmra.mxu0 %v70
    %v84 = vpop.f32.mrf.mxu0
    %v85 = vadd.f32 0.0, %v84
    %v86 = vpop.f32.mrf.mxu0
    %v87 = vadd.f32 0.0, %v86
    %88 = vmatmul.bf16.gmra.mxu0 %v73
    %v89 = vpop.f32.mrf.mxu0
    %v90 = vadd.f32 0.0, %v89
    %v91 = vpop.f32.mrf.mxu0
    %v92 = vadd.f32 0.0, %v91
    %93 = vdwg.mxu0
    %v94 = vmax.f32 %v85, 0.0
    %v95 = vmax.f32 %v87, 0.0
    %v96 = vmax.f32 %v90, 0.0
    %v97 = vmax.f32 %v92, 0.0
    %v98 = vpack.c.bf16 %v94, %v94
    %v99 = vpack.c.bf16 %v95, %v95
    %v100 = vpack.c.bf16 %v96, %v96
    %v101 = vpack.c.bf16 %v97, %v97
    %v102 = vld [vmem:[%s3] sm:$0x1]
    %v103 = vld [vmem:[%s4] sm:$0x1]
    %v104 = vld [vmem:[%s2] sm:$0xf]
    %v105 = vld [vmem:[%s2 + $0x4] sm:$0xf]
    %v106 = vld [vmem:[%s2 + $0x8] sm:$0xf]
    %v107 = vld [vmem:[%s2 + $0xc] sm:$0xf]
    %v108 = vld [vmem:[%s2 + $0x10] sm:$0xf]
    %v109 = vld [vmem:[%s2 + $0x14] sm:$0xf]
    %v110 = vld [vmem:[%s2 + $0x18] sm:$0xf]
    %v111 = vld [vmem:[%s2 + $0x1c] sm:$0xf]
    %v116 = vunpack.c.l.b16 %v98
    %v117 = vunpack.c.l.b16 %v99
    %v118 = vunpack.c.l.b16 %v100
    %v119 = vunpack.c.l.b16 %v101
    %v120 = vpack.c.b16 %v117, %v116
    %v121 = vpack.c.b16 %v119, %v118
    %v130 = vunpack.c.l.b16 %v104
    %v131 = vunpack.c.l.b16 %v105
    %v132 = vunpack.c.l.b16 %v106
    %v133 = vunpack.c.l.b16 %v107
    %v134 = vunpack.c.l.b16 %v108
    %v135 = vunpack.c.l.b16 %v109
    %v136 = vunpack.c.l.b16 %v110
    %v137 = vunpack.c.l.b16 %v111
    %v138 = vpack.c.b16 %v131, %v130
    %v139 = vpack.c.b16 %v133, %v132
    %v140 = vpack.c.b16 %v135, %v134
    %v141 = vpack.c.b16 %v137, %v136
    %v147 = vsel %vm68, %v120, 0
    %v150 = vsel %vm68, %v121, 0
    %152 = vmatpush.bf16.msra.mxu0 0
    %153 = vmatpush.bf16.msra.mxu0 0
    %154 = vmatpush.bf16.msra.mxu0 0
    %155 = vmatpush.bf16.msra.mxu0 0
    %156 = vmatpush.bf16.msra.mxu0 %v141
    %157 = vmatpush.bf16.msra.mxu0 %v140
    %158 = vmatpush.bf16.msra.mxu0 %v139
    %159 = vmatpush.bf16.msra.mxu0 %v138
    %160 = vmatmul.bf16.gmra.mxu0 %v147
    %v161 = vpop.f32.mrf.mxu0
    %v162 = vadd.f32 0.0, %v161
    %v163 = vpop.f32.mrf.mxu0
    %v164 = vadd.f32 0.0, %v163
    %165 = vmatmul.bf16.gmra.mxu0 %v150
    %v166 = vpop.f32.mrf.mxu0
    %v167 = vadd.f32 0.0, %v166
    %v168 = vpop.f32.mrf.mxu0
    %v169 = vadd.f32 0.0, %v168
    %170 = vdwg.mxu0
    %vm171 = vcmask 261120
    %v172 = vsel %vm171, %v162, 0.0
    %173 = vadd.xlane.f32.xlu0 %v172
    %v174 = vpop.xlane.xlu0 %173
    %v175 = vsel %vm171, %v164, 0.0
    %176 = vadd.xlane.f32.xlu0 %v175
    %v177 = vpop.xlane.xlu0 %176
    %v178 = vsel %vm171, %v167, 0.0
    %179 = vadd.xlane.f32.xlu0 %v178
    %v180 = vpop.xlane.xlu0 %179
    %v181 = vsel %vm171, %v169, 0.0
    %182 = vadd.xlane.f32.xlu0 %v181
    %v183 = vpop.xlane.xlu0 %182
    %v184 = vrcp.pop 32.0
    %v185 = vmul.f32 32.0, %v184
    %v186 = vsub.f32 1.0, %v185
    %v187 = vmul.f32 %v184, %v186
    %v188 = vadd.f32 %v184, %v187
    %vm189 = vweird.f32 %v184
    %v190 = vsel %vm189, %v184, %v188
    %v191 = vmul.f32 %v174, %v190
    %v192 = vmul.f32 %v177, %v190
    %v193 = vmul.f32 %v180, %v190
    %v194 = vmul.f32 %v183, %v190
    %v195 = vsub.f32 %v162, %v191
    %v196 = vsub.f32 %v164, %v192
    %v197 = vsub.f32 %v167, %v193
    %v198 = vsub.f32 %v169, %v194
    %v199 = vmul.f32 %v195, %v195
    %v200 = vmul.f32 %v196, %v196
    %v201 = vmul.f32 %v197, %v197
    %v202 = vmul.f32 %v198, %v198
    %v203 = vsel %vm171, %v199, 0.0
    %204 = vadd.xlane.f32.xlu0 %v203
    %v205 = vpop.xlane.xlu0 %204
    %v206 = vsel %vm171, %v200, 0.0
    %207 = vadd.xlane.f32.xlu0 %v206
    %v208 = vpop.xlane.xlu0 %207
    %v209 = vsel %vm171, %v201, 0.0
    %210 = vadd.xlane.f32.xlu0 %v209
    %v211 = vpop.xlane.xlu0 %210
    %v212 = vsel %vm171, %v202, 0.0
    %213 = vadd.xlane.f32.xlu0 %v212
    %v214 = vpop.xlane.xlu0 %213
    %v215 = vmul.f32 %v205, %v190
    %v216 = vmul.f32 %v208, %v190
    %v217 = vmul.f32 %v211, %v190
    %v218 = vmul.f32 %v214, %v190
    %v219 = vadd.f32 %v215, 1e-05
    %v220 = vadd.f32 %v216, 1e-05
    %v221 = vadd.f32 %v217, 1e-05
    %v222 = vadd.f32 %v218, 1e-05
    %v223 = vrsqrt.pop %v219
    %v224 = vmul.f32 %v223, %v219
    %v225 = vmul.f32 %v224, %v223
    %v226 = vmul.f32 0.5, %v225
    %v227 = vsub.f32 1.5, %v226
    %v228 = vmul.f32 %v223, %v227
    %vm229 = vweird.f32 %v219
    %vm230 = vweird.f32 %v223
    %vm231 = vmor %vm229, %vm230
    %v232 = vsel %vm231, %v223, %v228
    %v233 = vrsqrt.pop %v220
    %v234 = vmul.f32 %v233, %v220
    %v235 = vmul.f32 %v234, %v233
    %v236 = vmul.f32 0.5, %v235
    %v237 = vsub.f32 1.5, %v236
    %v238 = vmul.f32 %v233, %v237
    %vm239 = vweird.f32 %v220
    %vm240 = vweird.f32 %v233
    %vm241 = vmor %vm239, %vm240
    %v242 = vsel %vm241, %v233, %v238
    %v243 = vrsqrt.pop %v221
    %v244 = vmul.f32 %v243, %v221
    %v245 = vmul.f32 %v244, %v243
    %v246 = vmul.f32 0.5, %v245
    %v247 = vsub.f32 1.5, %v246
    %v248 = vmul.f32 %v243, %v247
    %vm249 = vweird.f32 %v221
    %vm250 = vweird.f32 %v243
    %vm251 = vmor %vm249, %vm250
    %v252 = vsel %vm251, %v243, %v248
    %v253 = vrsqrt.pop %v222
    %v254 = vmul.f32 %v253, %v222
    %v255 = vmul.f32 %v254, %v253
    %v256 = vmul.f32 0.5, %v255
    %v257 = vsub.f32 1.5, %v256
    %v258 = vmul.f32 %v253, %v257
    %vm259 = vweird.f32 %v222
    %vm260 = vweird.f32 %v253
    %vm261 = vmor %vm259, %vm260
    %v262 = vsel %vm261, %v253, %v258
    %v263 = vmul.f32 %v195, %v232
    %v264 = vmul.f32 %v196, %v242
    %v265 = vmul.f32 %v197, %v252
    %v266 = vmul.f32 %v198, %v262
    %v268 = vperm.slane %v102, 0
    %v270 = vmul.f32 %v263, %v268
    %v271 = vmul.f32 %v264, %v268
    %v272 = vmul.f32 %v265, %v268
    %v273 = vmul.f32 %v266, %v268
    %v275 = vperm.slane %v103, 0
    %v277 = vadd.f32 %v270, %v275
    %v278 = vadd.f32 %v271, %v275
    %v279 = vadd.f32 %v272, %v275
    %v280 = vadd.f32 %v273, %v275
    %281 = vrot.lane.b32.xlu0 %v120, 64
    %v282 = vpop.permute.xlu0 %281
    %283 = vrot.lane.b32.xlu0 %v121, 64
    %v284 = vpop.permute.xlu0 %283
    %v286 = vsel %vm68, %v282, 0
    %v289 = vsel %vm68, %v284, 0
    %291 = vmatpush.bf16.msra.mxu0 0
    %292 = vmatpush.bf16.msra.mxu0 0
    %293 = vmatpush.bf16.msra.mxu0 0
    %294 = vmatpush.bf16.msra.mxu0 0
    %295 = vmatpush.bf16.msra.mxu0 %v141
    %296 = vmatpush.bf16.msra.mxu0 %v140
    %297 = vmatpush.bf16.msra.mxu0 %v139
    %298 = vmatpush.bf16.msra.mxu0 %v138
    %299 = vmatmul.bf16.gmra.mxu0 %v286
    %v300 = vpop.f32.mrf.mxu0
    %v301 = vadd.f32 0.0, %v300
    %v302 = vpop.f32.mrf.mxu0
    %v303 = vadd.f32 0.0, %v302
    %304 = vmatmul.bf16.gmra.mxu0 %v289
    %v305 = vpop.f32.mrf.mxu0
    %v306 = vadd.f32 0.0, %v305
    %v307 = vpop.f32.mrf.mxu0
    %v308 = vadd.f32 0.0, %v307
    %309 = vdwg.mxu0
    %v310 = vsel %vm171, %v301, 0.0
    %311 = vadd.xlane.f32.xlu0 %v310
    %v312 = vpop.xlane.xlu0 %311
    %v313 = vsel %vm171, %v303, 0.0
    %314 = vadd.xlane.f32.xlu0 %v313
    %v315 = vpop.xlane.xlu0 %314
    %v316 = vsel %vm171, %v306, 0.0
    %317 = vadd.xlane.f32.xlu0 %v316
    %v318 = vpop.xlane.xlu0 %317
    %v319 = vsel %vm171, %v308, 0.0
    %320 = vadd.xlane.f32.xlu0 %v319
    %v321 = vpop.xlane.xlu0 %320
    %v322 = vmul.f32 %v312, %v190
    %v323 = vmul.f32 %v315, %v190
    %v324 = vmul.f32 %v318, %v190
    %v325 = vmul.f32 %v321, %v190
    %v326 = vsub.f32 %v301, %v322
    %v327 = vsub.f32 %v303, %v323
    %v328 = vsub.f32 %v306, %v324
    %v329 = vsub.f32 %v308, %v325
    %v330 = vmul.f32 %v326, %v326
    %v331 = vmul.f32 %v327, %v327
    %v332 = vmul.f32 %v328, %v328
    %v333 = vmul.f32 %v329, %v329
    %v334 = vsel %vm171, %v330, 0.0
    %335 = vadd.xlane.f32.xlu0 %v334
    %v336 = vpop.xlane.xlu0 %335
    %v337 = vsel %vm171, %v331, 0.0
    %338 = vadd.xlane.f32.xlu0 %v337
    %v339 = vpop.xlane.xlu0 %338
    %v340 = vsel %vm171, %v332, 0.0
    %341 = vadd.xlane.f32.xlu0 %v340
    %v342 = vpop.xlane.xlu0 %341
    %v343 = vsel %vm171, %v333, 0.0
    %344 = vadd.xlane.f32.xlu0 %v343
    %v345 = vpop.xlane.xlu0 %344
    %v346 = vmul.f32 %v336, %v190
    %v347 = vmul.f32 %v339, %v190
    %v348 = vmul.f32 %v342, %v190
    %v349 = vmul.f32 %v345, %v190
    %v350 = vadd.f32 %v346, 1e-05
    %v351 = vadd.f32 %v347, 1e-05
    %v352 = vadd.f32 %v348, 1e-05
    %v353 = vadd.f32 %v349, 1e-05
    %v354 = vrsqrt.pop %v350
    %v355 = vmul.f32 %v354, %v350
    %v356 = vmul.f32 %v355, %v354
    %v357 = vmul.f32 0.5, %v356
    %v358 = vsub.f32 1.5, %v357
    %v359 = vmul.f32 %v354, %v358
    %vm360 = vweird.f32 %v350
    %vm361 = vweird.f32 %v354
    %vm362 = vmor %vm360, %vm361
    %v363 = vsel %vm362, %v354, %v359
    %v364 = vrsqrt.pop %v351
    %v365 = vmul.f32 %v364, %v351
    %v366 = vmul.f32 %v365, %v364
    %v367 = vmul.f32 0.5, %v366
    %v368 = vsub.f32 1.5, %v367
    %v369 = vmul.f32 %v364, %v368
    %vm370 = vweird.f32 %v351
    %vm371 = vweird.f32 %v364
    %vm372 = vmor %vm370, %vm371
    %v373 = vsel %vm372, %v364, %v369
    %v374 = vrsqrt.pop %v352
    %v375 = vmul.f32 %v374, %v352
    %v376 = vmul.f32 %v375, %v374
    %v377 = vmul.f32 0.5, %v376
    %v378 = vsub.f32 1.5, %v377
    %v379 = vmul.f32 %v374, %v378
    %vm380 = vweird.f32 %v352
    %vm381 = vweird.f32 %v374
    %vm382 = vmor %vm380, %vm381
    %v383 = vsel %vm382, %v374, %v379
    %v384 = vrsqrt.pop %v353
    %v385 = vmul.f32 %v384, %v353
    %v386 = vmul.f32 %v385, %v384
    %v387 = vmul.f32 0.5, %v386
    %v388 = vsub.f32 1.5, %v387
    %v389 = vmul.f32 %v384, %v388
    %vm390 = vweird.f32 %v353
    %vm391 = vweird.f32 %v384
    %vm392 = vmor %vm390, %vm391
    %v393 = vsel %vm392, %v384, %v389
    %v394 = vmul.f32 %v326, %v363
    %v395 = vmul.f32 %v327, %v373
    %v396 = vmul.f32 %v328, %v383
    %v397 = vmul.f32 %v329, %v393
    %v398 = vmul.f32 %v394, %v268
    %v399 = vmul.f32 %v395, %v268
    %v400 = vmul.f32 %v396, %v268
    %v401 = vmul.f32 %v397, %v268
    %v402 = vadd.f32 %v398, %v275
    %v403 = vadd.f32 %v399, %v275
    %v404 = vadd.f32 %v400, %v275
    %v405 = vadd.f32 %v401, %v275
    %410 = vrot.lane.b32.xlu0 %v402, 32
    %v411 = vpop.permute.xlu0 %410
    %412 = vrot.lane.b32.xlu0 %v403, 32
    %v413 = vpop.permute.xlu0 %412
    %414 = vrot.lane.b32.xlu0 %v404, 32
    %v415 = vpop.permute.xlu0 %414
    %416 = vrot.lane.b32.xlu0 %v405, 32
    %v417 = vpop.permute.xlu0 %416
    %v422 = vsel %vm171, %v277, %v411
    %v423 = vsel %vm171, %v278, %v413
    %v424 = vsel %vm171, %v279, %v415
    %v425 = vsel %vm171, %v280, %v417
    %426 = vst.msk [vmem:[#allocation2] sm:$0xff] %vm68, %v422
    %427 = vst.msk [vmem:[#allocation2 + $0x8] sm:$0xff] %vm68, %v423
    %428 = vst.msk [vmem:[#allocation2 + $0x10] sm:$0xff] %vm68, %v424
    %429 = vst.msk [vmem:[#allocation2 + $0x18] sm:$0xff] %vm68, %v425
    // Predicated region
    $region22: #{tpu_custom_call.1} parent=1 // pred_check
      _
    $region23: #{tpu_custom_call.1} parent=1 // pred_check_branch
      %431 = sbr.rel (0) target = $region25
    $region24: #{tpu_custom_call.1} parent=1 // pred_region
      %433 = vsyncadd [#allocation3], 0
      %s434 = sshll.u32 [#allocation2], 4
      %s435 = int_to_ptr.vmem [resolvable:$true] %s434
      %s436 = sshll.u32 %s5, 4
      %s437 = int_to_ptr.hbm [resolvable:$true] %s436
      %442 = dma.vmem_to_hbm [thread:$0]  %s435, 512, %s437, [#allocation3], 128, 128, 8
    $region25: #{tpu_custom_call.1} parent=1 // pred_fallthru
      _
    // Predicated region
    $region26: #{tpu_custom_call.1} parent=1 // pred_check
      _
    $region27: #{tpu_custom_call.1} parent=1 // pred_check_branch
      %444 = sbr.rel (0) target = $region29
    $region28: #{tpu_custom_call.1} parent=1 // pred_region
      %446 = dma.done [#allocation3], 512
    $region29: #{tpu_custom_call.1} parent=1 // pred_fallthru
      _
    %447 = vsyncpa [#allocation3], 1

</llo_original>
